<compile_context>
chip_gen: v6e
topology: v6e:2x2x1
jax: 0.10.0
libtpu: 0.0.40
codegen_flags: <defaults>
</compile_context>

<pallas_src>
import functools

import jax
import jax.numpy as jnp
from jax.experimental import pallas as pl
from jax.experimental.pallas import tpu as pltpu


_LANE = 128
_SUBLANE = 8


def _round_up(x, m):
    return ((x + m - 1) // m) * m


def _softplus(x):
    # Matches torch.nn.Softplus(beta=1, threshold=20):
    #   softplus(x) = log1p(exp(x)), but returns x when x > threshold.
    return jnp.where(x > 20.0, x, jnp.log1p(jnp.exp(jnp.minimum(x, 20.0))))


def _mlp_kernel(z_ref, w1_ref, b1_ref, w2_ref, b2_ref, out_ref):
    # fc1: cast the streamed z tile to the weight dtype in-kernel (free VPU op hidden
    # under the tile DMA), run on the MXU, accumulate in f32.
    z = z_ref[...].astype(w1_ref.dtype)
    h = jnp.dot(z, w1_ref[...], preferred_element_type=jnp.float32)
    h = _softplus(h + b1_ref[...])                      # f32 bias add + softplus (VPU/EUP)
    # fc21: activations back to the weight dtype for full-rate MXU, f32 accumulation.
    o = jnp.dot(h.astype(w2_ref.dtype), w2_ref[...], preferred_element_type=jnp.float32)
    out_ref[...] = (o + b2_ref[...]).astype(out_ref.dtype)   # lane-dense (TB, 128) store


def prepare_params(w1, b1, w2, b2, *, compute_dtype=jnp.bfloat16):
    """One-time parameter prep (hoisted out of the per-call path).

    Pads the lane dims (hidden, output) of the weights/biases up to multiples of 128 and
    casts the weights to the MXU operand dtype. The K dim of fc1 stays at z_dim so z can
    be streamed unpadded.
    """
    Z, H = w1.shape
    O = w2.shape[1]
    HP, OP = _round_up(H, _LANE), _round_up(O, _LANE)

    w1p = jnp.zeros((Z, HP), compute_dtype).at[:, :H].set(w1.astype(compute_dtype))
    # Padded hidden lanes produce softplus(0) = ln 2 in the kernel; they are annihilated
    # because the corresponding rows of w2p are ZERO-initialized. Keep this invariant.
    w2p = jnp.zeros((HP, OP), compute_dtype).at[:H, :O].set(w2.astype(compute_dtype))
    b1p = jnp.zeros((1, HP), jnp.float32).at[0, :H].set(b1.reshape(-1))
    b2p = jnp.zeros((1, OP), jnp.float32).at[0, :O].set(b2.reshape(-1))
    return w1p, b1p, w2p, b2p


def example_module_forward(z, w1p, b1p, w2p, b2p, *, output_dim, batch_tile=None):
    """Forward of ExampleTorchModule: fc21(softplus(fc1(z))).

    z:    (B, z_dim) f32, unpadded.
    w1p:  (z_dim, HP) compute dtype     (pre-padded via prepare_params)
    b1p:  (1, HP) f32
    w2p:  (HP, OP) compute dtype
    b2p:  (1, OP) f32
    output_dim: true (unpadded) output width to return.
    batch_tile: rows per grid step; None => single grid step over the whole batch
                (best on v5e/v6e at small B). Use ~B/2 on v7x to feed both TensorCores.
    """
    B, Z = z.shape
    HP = w1p.shape[1]
    OP = w2p.shape[1]

    if batch_tile is None:
        TB = _round_up(B, _SUBLANE)                       # one grid step
    else:
        TB = max(_SUBLANE, _round_up(min(batch_tile, B), _SUBLANE))
    BP = _round_up(B, TB)
    # Guard pathological padding (e.g. B just past a tile boundary nearly doubling work):
    # if padding exceeds ~12.5% of B, fall back to a single full-batch tile.
    if BP - B > max(_SUBLANE, B // 8):
        TB = _round_up(B, _SUBLANE)
        BP = TB

    zp = z if BP == B else jnp.pad(z, ((0, BP - B), (0, 0)))

    w_itemsize = jnp.dtype(w1p.dtype).itemsize
    cost = pl.CostEstimate(
        flops=2 * BP * (Z * HP + HP * OP),
        transcendentals=2 * BP * HP,                      # exp + log1p per hidden unit
        bytes_accessed=int(zp.size * zp.dtype.itemsize
                           + (w1p.size + w2p.size) * w_itemsize
                           + (b1p.size + b2p.size + BP * OP) * 4),
    )

    # Resident operands: constant index_map + single buffering (no per-step re-DMA,
    # half the VMEM footprint of the default double buffer).
    resident = functools.partial(pl.BlockSpec, pipeline_mode=pl.Buffered(1))

    out_padded = pl.pallas_call(
        _mlp_kernel,
        out_shape=jax.ShapeDtypeStruct((BP, OP), jnp.float32),
        grid_spec=pltpu.PrefetchScalarGridSpec(
            num_scalar_prefetch=0,
            grid=(BP // TB,),
            in_specs=[
                pl.BlockSpec((TB, Z), lambda i: (i, 0)),   # z: streamed per batch tile
                resident((Z, HP), lambda i: (0, 0)),       # w1: resident in VMEM
                resident((1, HP), lambda i: (0, 0)),       # b1: resident
                resident((HP, OP), lambda i: (0, 0)),      # w2: resident
                resident((1, OP), lambda i: (0, 0)),       # b2: resident
            ],
            out_specs=pl.BlockSpec((TB, OP), lambda i: (i, 0)),  # lane-dense output slab
        ),
        compiler_params=pltpu.CompilerParams(
            dimension_semantics=("parallel",),             # shard batch tiles across TCs (v7x)
        ),
        cost_estimate=cost,
    )(zp, w1p, b1p, w2p, b2p)

    # Strip batch / output-lane padding.
    return out_padded[:B, :output_dim]


def reference_forward(z, w1, b1, w2, b2):
    h = jax.nn.softplus(z @ w1 + b1)
    return h @ w2 + b2


if __name__ == "__main__":
    # Shapes consistent with the module: z_dim=32, hidden_dim=64, output_dim=16, B=256.
    B, Z_DIM, HIDDEN_DIM, OUTPUT_DIM = 256, 32, 64, 16

    key = jax.random.PRNGKey(0)
    k_z, k_w1, k_b1, k_w2, k_b2 = jax.random.split(key, 5)

    # Deterministic synthetic params (mimics torch Linear's uniform(-1/sqrt(in), 1/sqrt(in)))
    lim1 = 1.0 / (Z_DIM ** 0.5)
    lim2 = 1.0 / (HIDDEN_DIM ** 0.5)
    w1 = jax.random.uniform(k_w1, (Z_DIM, HIDDEN_DIM), jnp.float32, -lim1, lim1)
    b1 = jax.random.uniform(k_b1, (HIDDEN_DIM,), jnp.float32, -lim1, lim1)
    w2 = jax.random.uniform(k_w2, (HIDDEN_DIM, OUTPUT_DIM), jnp.float32, -lim2, lim2)
    b2 = jax.random.uniform(k_b2, (OUTPUT_DIM,), jnp.float32, -lim2, lim2)
    z = jax.random.normal(k_z, (B, Z_DIM), jnp.float32)

    ref = reference_forward(z, w1, b1, w2, b2)

    # 1) f32 operand path, single-step grid (exact vs reference; padding is inert).
    params_f32 = jax.block_until_ready(
        prepare_params(w1, b1, w2, b2, compute_dtype=jnp.float32))
    fwd_f32 = jax.jit(functools.partial(example_module_forward, output_dim=OUTPUT_DIM))
    out_f32 = jax.block_until_ready(fwd_f32(z, *params_f32))
    assert out_f32.shape == (B, OUTPUT_DIM)
    assert jnp.allclose(out_f32, ref, atol=1e-4, rtol=1e-4), "f32 Pallas kernel mismatch"

    # 2) bf16 operand / f32-accumulate path (full-rate MXU on v6e/v7x).
    params_bf16 = jax.block_until_ready(
        prepare_params(w1, b1, w2, b2, compute_dtype=jnp.bfloat16))
    fwd_bf16 = jax.jit(functools.partial(example_module_forward, output_dim=OUTPUT_DIM))
    out_bf16 = jax.block_until_ready(fwd_bf16(z, *params_bf16))
    assert out_bf16.shape == (B, OUTPUT_DIM)
    assert jnp.allclose(out_bf16, ref, atol=5e-2, rtol=5e-2), "bf16 Pallas kernel mismatch"

    # 3) Two-step "parallel" grid (v7x dual-TC configuration) for pipeline coverage.
    fwd_2tc = jax.jit(functools.partial(
        example_module_forward, output_dim=OUTPUT_DIM, batch_tile=B // 2))
    out_2tc = jax.block_until_ready(fwd_2tc(z, *params_f32))
    assert out_2tc.shape == (B, OUTPUT_DIM)
    assert jnp.allclose(out_2tc, ref, atol=1e-4, rtol=1e-4), "2-step Pallas kernel mismatch"

    print("KERNEL_OK")
</pallas_src>

<mosaic_0001>
module attributes {stable_mosaic.version = 11 : i64} {
  func.func @_mlp_kernel(%arg0: i32, %arg1: memref<256x32xf32, #tpu.memory_space<vmem>>, %arg2: memref<32x128xf32, #tpu.memory_space<vmem>>, %arg3: memref<1x128xf32, #tpu.memory_space<vmem>>, %arg4: memref<128x128xf32, #tpu.memory_space<vmem>>, %arg5: memref<1x128xf32, #tpu.memory_space<vmem>>, %arg6: memref<256x128xf32, #tpu.memory_space<vmem>>) attributes {dimension_semantics = [#tpu.dimension_semantics<parallel>], iteration_bounds = array<i64: 1>, scalar_prefetch = 0 : i64, scratch_operands = 0 : i64, tpu.core_type = #tpu.core_type<tc>, window_params = [{transform_indices = @transform_0, window_bounds = array<i64: 256, 32>}, {pipeline_mode = #tpu.pipeline_mode<synchronous>, transform_indices = @transform_1, window_bounds = array<i64: 32, 128>}, {pipeline_mode = #tpu.pipeline_mode<synchronous>, transform_indices = @transform_2, window_bounds = array<i64: 1, 128>}, {pipeline_mode = #tpu.pipeline_mode<synchronous>, transform_indices = @transform_3, window_bounds = array<i64: 128, 128>}, {pipeline_mode = #tpu.pipeline_mode<synchronous>, transform_indices = @transform_4, window_bounds = array<i64: 1, 128>}, {transform_indices = @transform_5, window_bounds = array<i64: 256, 128>}]} {
    %c0 = arith.constant 0 : index
    %c0_0 = arith.constant 0 : index
    %0 = vector.load %arg1[%c0, %c0_0] : memref<256x32xf32, #tpu.memory_space<vmem>>, vector<256x32xf32>
    %c0_1 = arith.constant 0 : index
    %c0_2 = arith.constant 0 : index
    %1 = vector.load %arg2[%c0_1, %c0_2] : memref<32x128xf32, #tpu.memory_space<vmem>>, vector<32x128xf32>
    %cst = arith.constant dense<0.000000e+00> : vector<256x128xf32>
    %2 = tpu.matmul %0, %1, %cst {dimension_numbers = #tpu.dot_dimension_numbers<[1], [0], [0], [1], [0, 0, 1, 1], [], []>} : vector<256x32xf32>, vector<32x128xf32>, vector<256x128xf32> -> vector<256x128xf32>
    %c0_3 = arith.constant 0 : index
    %c0_4 = arith.constant 0 : index
    %3 = vector.load %arg3[%c0_3, %c0_4] : memref<1x128xf32, #tpu.memory_space<vmem>>, vector<1x128xf32>
    %4 = vector.broadcast %3 : vector<1x128xf32> to vector<256x128xf32>
    %5 = arith.addf %2, %4 : vector<256x128xf32>
    %cst_5 = arith.constant 2.000000e+01 : f32
    %6 = vector.broadcast %cst_5 : f32 to vector<256x128xf32>
    %7 = arith.cmpf ogt, %5, %6 : vector<256x128xf32>
    %cst_6 = arith.constant 2.000000e+01 : f32
    %8 = vector.broadcast %cst_6 : f32 to vector<256x128xf32>
    %9 = arith.minimumf %5, %8 : vector<256x128xf32>
    %10 = math.exp %9 : vector<256x128xf32>
    %11 = math.log1p %10 : vector<256x128xf32>
    %12 = arith.select %7, %5, %11 : vector<256x128xi1>, vector<256x128xf32>
    %c0_7 = arith.constant 0 : index
    %c0_8 = arith.constant 0 : index
    %13 = vector.load %arg4[%c0_7, %c0_8] : memref<128x128xf32, #tpu.memory_space<vmem>>, vector<128x128xf32>
    %cst_9 = arith.constant dense<0.000000e+00> : vector<256x128xf32>
    %14 = tpu.matmul %12, %13, %cst_9 {dimension_numbers = #tpu.dot_dimension_numbers<[1], [0], [0], [1], [0, 0, 1, 1], [], []>} : vector<256x128xf32>, vector<128x128xf32>, vector<256x128xf32> -> vector<256x128xf32>
    %c0_10 = arith.constant 0 : index
    %c0_11 = arith.constant 0 : index
    %15 = vector.load %arg5[%c0_10, %c0_11] : memref<1x128xf32, #tpu.memory_space<vmem>>, vector<1x128xf32>
    %16 = vector.broadcast %15 : vector<1x128xf32> to vector<256x128xf32>
    %17 = arith.addf %14, %16 : vector<256x128xf32>
    %c0_12 = arith.constant 0 : index
    %c0_13 = arith.constant 0 : index
    %18 = vector.load %arg6[%c0_12, %c0_13] : memref<256x128xf32, #tpu.memory_space<vmem>>, vector<256x128xf32>
    tpu.vector_store %arg6[%c0_12, %c0_13], %17 {strides = array<i32>} : memref<256x128xf32, #tpu.memory_space<vmem>>, vector<256x128xf32>,
    return
  }
  func.func @transform_0(%arg0: i32) -> (i32, i32) {
    %c0_i32 = arith.constant 0 : i32
    %c0_i32_0 = arith.constant 0 : i32
    return %arg0, %c0_i32 : i32, i32
  }
  func.func @transform_1(%arg0: i32) -> (i32, i32) {
    %c0_i32 = arith.constant 0 : i32
    %c0_i32_0 = arith.constant 0 : i32
    %c0_i32_1 = arith.constant 0 : i32
    return %c0_i32, %c0_i32_0 : i32, i32
  }
  func.func @transform_2(%arg0: i32) -> (i32, i32) {
    %c0_i32 = arith.constant 0 : i32
    %c0_i32_0 = arith.constant 0 : i32
    %c0_i32_1 = arith.constant 0 : i32
    return %c0_i32, %c0_i32_0 : i32, i32
  }
  func.func @transform_3(%arg0: i32) -> (i32, i32) {
    %c0_i32 = arith.constant 0 : i32
    %c0_i32_0 = arith.constant 0 : i32
    %c0_i32_1 = arith.constant 0 : i32
    return %c0_i32, %c0_i32_0 : i32, i32
  }
  func.func @transform_4(%arg0: i32) -> (i32, i32) {
    %c0_i32 = arith.constant 0 : i32
    %c0_i32_0 = arith.constant 0 : i32
    %c0_i32_1 = arith.constant 0 : i32
    return %c0_i32, %c0_i32_0 : i32, i32
  }
  func.func @transform_5(%arg0: i32) -> (i32, i32) {
    %c0_i32 = arith.constant 0 : i32
    %c0_i32_0 = arith.constant 0 : i32
    return %arg0, %c0_i32 : i32, i32
  }
}

</mosaic_0001>

<llo_original>
// kernel: example_module_forward.1
$region0: #{example_module_forward.1}
  #allocation0 [shape = 'u32[]', space=smem, size = 0x4, offset = 0x4, fixed_abs, tag = 'smem constant byte address 0x4 - core index']
  #allocation1 [shape = 'u32[144,128]{1,0:T(1,128)}', space=vmem, size = 0x12000, scoped, tag = 'internal scratch']
  %s0 = inlined_call_operand.vmem [shape: f32[256,32], index: 0, kind: input, shape index: {}]
  %s1 = inlined_call_operand.vmem [shape: f32[32,128], index: 1, kind: input, shape index: {}]
  %s2 = inlined_call_operand.vmem [shape: f32[1,128], index: 2, kind: input, shape index: {}]
  %s3 = inlined_call_operand.vmem [shape: f32[128,128], index: 3, kind: input, shape index: {}]
  %s4 = inlined_call_operand.vmem [shape: f32[1,128], index: 4, kind: input, shape index: {}]
  %s5 = inlined_call_operand.vmem [shape: f32[256,128], index: 5, kind: output, shape index: {}]
  %s6 = sld [smem:[#allocation0]]
  $region30: #{example_module_forward.1} parent=0
    _
  %s8 = ssub.s32 1, %s6
  %s9 = scalar_select 0, %s8, %s6
  // Predicated region
  $region2: #{example_module_forward.1} parent=0 // pred_check
    _
  $region3: #{example_module_forward.1} parent=0 // pred_check_branch
    %11 = sbr.rel (0) target = $region5
  $region4: #{example_module_forward.1} parent=0 // pred_region
    _
  $region5: #{example_module_forward.1} parent=0 // pred_fallthru
    _
  // Predicated region
  $region6: #{example_module_forward.1} parent=0 // pred_check
    _
  $region7: #{example_module_forward.1} parent=0 // pred_check_branch
    %13 = sbr.rel (0) target = $region9
  $region8: #{example_module_forward.1} parent=0 // pred_region
    _
  $region9: #{example_module_forward.1} parent=0 // pred_fallthru
    _
  // Predicated region
  $region10: #{example_module_forward.1} parent=0 // pred_check
    _
  $region11: #{example_module_forward.1} parent=0 // pred_check_branch
    %15 = sbr.rel (0) target = $region13
  $region12: #{example_module_forward.1} parent=0 // pred_region
    _
  $region13: #{example_module_forward.1} parent=0 // pred_fallthru
    _
  // Predicated region
  $region14: #{example_module_forward.1} parent=0 // pred_check
    _
  $region15: #{example_module_forward.1} parent=0 // pred_check_branch
    %17 = sbr.rel (0) target = $region17
  $region16: #{example_module_forward.1} parent=0 // pred_region
    _
  $region17: #{example_module_forward.1} parent=0 // pred_fallthru
    _
  // Predicated region
  $region18: #{example_module_forward.1} parent=0 // pred_check
    _
  $region19: #{example_module_forward.1} parent=0 // pred_check_branch
    %19 = sbr.rel (0) target = $region21
  $region20: #{example_module_forward.1} parent=0 // pred_region
    _
  $region21: #{example_module_forward.1} parent=0 // pred_fallthru
    _
  %v20 = vld [vmem:[%s0] sm:$0xff]
  %v21 = vld [vmem:[%s0 + $0x8] sm:$0xff]
  %v22 = vld [vmem:[%s0 + $0x10] sm:$0xff]
  %v23 = vld [vmem:[%s0 + $0x18] sm:$0xff]
  %v24 = vld [vmem:[%s0 + $0x20] sm:$0xff]
  %v25 = vld [vmem:[%s0 + $0x28] sm:$0xff]
  %v26 = vld [vmem:[%s0 + $0x30] sm:$0xff]
  %v27 = vld [vmem:[%s0 + $0x38] sm:$0xff]
  %v28 = vld [vmem:[%s0 + $0x40] sm:$0xff]
  %v29 = vld [vmem:[%s0 + $0x48] sm:$0xff]
  %v30 = vld [vmem:[%s0 + $0x50] sm:$0xff]
  %v31 = vld [vmem:[%s0 + $0x58] sm:$0xff]
  %v32 = vld [vmem:[%s0 + $0x60] sm:$0xff]
  %v33 = vld [vmem:[%s0 + $0x68] sm:$0xff]
  %v34 = vld [vmem:[%s0 + $0x70] sm:$0xff]
  %v35 = vld [vmem:[%s0 + $0x78] sm:$0xff]
  %v36 = vld [vmem:[%s0 + $0x80] sm:$0xff]
  %v37 = vld [vmem:[%s0 + $0x88] sm:$0xff]
  %v38 = vld [vmem:[%s0 + $0x90] sm:$0xff]
  %v39 = vld [vmem:[%s0 + $0x98] sm:$0xff]
  %v40 = vld [vmem:[%s0 + $0xa0] sm:$0xff]
  %v41 = vld [vmem:[%s0 + $0xa8] sm:$0xff]
  %v42 = vld [vmem:[%s0 + $0xb0] sm:$0xff]
  %v43 = vld [vmem:[%s0 + $0xb8] sm:$0xff]
  %v44 = vld [vmem:[%s0 + $0xc0] sm:$0xff]
  %v45 = vld [vmem:[%s0 + $0xc8] sm:$0xff]
  %v46 = vld [vmem:[%s0 + $0xd0] sm:$0xff]
  %v47 = vld [vmem:[%s0 + $0xd8] sm:$0xff]
  %v48 = vld [vmem:[%s0 + $0xe0] sm:$0xff]
  %v49 = vld [vmem:[%s0 + $0xe8] sm:$0xff]
  %v50 = vld [vmem:[%s0 + $0xf0] sm:$0xff]
  %v51 = vld [vmem:[%s0 + $0xf8] sm:$0xff]
  %v52 = vld [vmem:[%s1] sm:$0xff]
  %v53 = vld [vmem:[%s1 + $0x8] sm:$0xff]
  %v54 = vld [vmem:[%s1 + $0x10] sm:$0xff]
  %v55 = vld [vmem:[%s1 + $0x18] sm:$0xff]
  %v56 = vld [vmem:[%s2] sm:$0x1]
  %v58 = vlaneseq
  %v59 = vshrl.u32 %v58, 7
  %v60 = vsub.s32 0, %v59
  %v61 = vrot.slane %v56, %v60
  %vm63 = vcmask 261120
  %v65 = vsel %vm63, %v20, 0
  %v68 = vsel %vm63, %v21, 0
  %v71 = vsel %vm63, %v22, 0
  %v74 = vsel %vm63, %v23, 0
  %v77 = vsel %vm63, %v24, 0
  %v80 = vsel %vm63, %v25, 0
  %v83 = vsel %vm63, %v26, 0
  %v86 = vsel %vm63, %v27, 0
  %v89 = vsel %vm63, %v28, 0
  %v92 = vsel %vm63, %v29, 0
  %v95 = vsel %vm63, %v30, 0
  %v98 = vsel %vm63, %v31, 0
  %v101 = vsel %vm63, %v32, 0
  %v104 = vsel %vm63, %v33, 0
  %v107 = vsel %vm63, %v34, 0
  %v110 = vsel %vm63, %v35, 0
  %v113 = vsel %vm63, %v36, 0
  %v116 = vsel %vm63, %v37, 0
  %v119 = vsel %vm63, %v38, 0
  %v122 = vsel %vm63, %v39, 0
  %v125 = vsel %vm63, %v40, 0
  %v128 = vsel %vm63, %v41, 0
  %v131 = vsel %vm63, %v42, 0
  %v134 = vsel %vm63, %v43, 0
  %v137 = vsel %vm63, %v44, 0
  %v140 = vsel %vm63, %v45, 0
  %v143 = vsel %vm63, %v46, 0
  %v146 = vsel %vm63, %v47, 0
  %v149 = vsel %vm63, %v48, 0
  %v152 = vsel %vm63, %v49, 0
  %v155 = vsel %vm63, %v50, 0
  %v158 = vsel %vm63, %v51, 0
  %160 = vmatprep.subr.mxu0 0.0
  %161 = vmatpush1.msra.mxu0 0.0
  %162 = vmatprep.subr.mxu0 0.0
  %163 = vmatpush1.msra.mxu0 0.0
  %164 = vmatprep.subr.mxu0 0.0
  %165 = vmatpush1.msra.mxu0 0.0
  %166 = vmatprep.subr.mxu0 0.0
  %167 = vmatpush1.msra.mxu0 0.0
  %168 = vmatprep.subr.mxu0 0.0
  %169 = vmatpush1.msra.mxu0 0.0
  %170 = vmatprep.subr.mxu0 0.0
  %171 = vmatpush1.msra.mxu0 0.0
  %172 = vmatprep.subr.mxu0 0.0
  %173 = vmatpush1.msra.mxu0 0.0
  %174 = vmatprep.subr.mxu0 0.0
  %175 = vmatpush1.msra.mxu0 0.0
  %176 = vmatprep.subr.mxu0 0.0
  %177 = vmatpush1.msra.mxu0 0.0
  %178 = vmatprep.subr.mxu0 0.0
  %179 = vmatpush1.msra.mxu0 0.0
  %180 = vmatprep.subr.mxu0 0.0
  %181 = vmatpush1.msra.mxu0 0.0
  %182 = vmatprep.subr.mxu0 0.0
  %183 = vmatpush1.msra.mxu0 0.0
  %184 = vmatprep.subr.mxu0 0.0
  %185 = vmatpush1.msra.mxu0 %v55
  %186 = vmatprep.subr.mxu0 0.0
  %187 = vmatpush1.msra.mxu0 %v54
  %188 = vmatprep.subr.mxu0 0.0
  %189 = vmatpush1.msra.mxu0 %v53
  %190 = vmatprep.subr.mxu0 0.0
  %191 = vmatpush1.msra.mxu0 %v52
  %192 = vmatprep.subr.mxu0 0.0
  %193 = vmatpush2.msra.mxu0 0.0
  %194 = vmatprep.subr.mxu0 0.0
  %195 = vmatpush2.msra.mxu0 0.0
  %196 = vmatprep.subr.mxu0 0.0
  %197 = vmatpush2.msra.mxu0 0.0
  %198 = vmatprep.subr.mxu0 0.0
  %199 = vmatpush2.msra.mxu0 0.0
  %200 = vmatprep.subr.mxu0 0.0
  %201 = vmatpush2.msra.mxu0 0.0
  %202 = vmatprep.subr.mxu0 0.0
  %203 = vmatpush2.msra.mxu0 0.0
  %204 = vmatprep.subr.mxu0 0.0
  %205 = vmatpush2.msra.mxu0 0.0
  %206 = vmatprep.subr.mxu0 0.0
  %207 = vmatpush2.msra.mxu0 0.0
  %208 = vmatprep.subr.mxu0 0.0
  %209 = vmatpush2.msra.mxu0 0.0
  %210 = vmatprep.subr.mxu0 0.0
  %211 = vmatpush2.msra.mxu0 0.0
  %212 = vmatprep.subr.mxu0 0.0
  %213 = vmatpush2.msra.mxu0 0.0
  %214 = vmatprep.subr.mxu0 0.0
  %215 = vmatpush2.msra.mxu0 0.0
  %216 = vmatprep.subr.mxu0 0.0
  %217 = vmatpush2.msra.mxu0 0.0
  %218 = vmatprep.subr.mxu0 0.0
  %219 = vmatpush2.msra.mxu0 0.0
  %220 = vmatprep.subr.mxu0 0.0
  %221 = vmatpush2.msra.mxu0 0.0
  %222 = vmatprep.subr.mxu0 0.0
  %223 = vmatpush2.msra.mxu0 0.0
  %224 = vmatprep.mubr.f32.mxu0 0.0
  %225 = vmatmul.mubr.f32.gmra.mxu0 %v65
  %v226 = vpop.f32.mrf.mxu0
  %v227 = vadd.f32 %v61, %v226
  %v228 = vpop.f32.mrf.mxu0
  %229 = vmatprep.mubr.f32.mxu0 0.0
  %230 = vmatmul.mubr.f32.gmra.mxu0 %v68
  %v231 = vpop.f32.mrf.mxu0
  %v232 = vadd.f32 %v61, %v231
  %v233 = vpop.f32.mrf.mxu0
  %234 = vmatprep.mubr.f32.mxu0 0.0
  %235 = vmatmul.mubr.f32.gmra.mxu0 %v71
  %v236 = vpop.f32.mrf.mxu0
  %v237 = vadd.f32 %v61, %v236
  %v238 = vpop.f32.mrf.mxu0
  %239 = vmatprep.mubr.f32.mxu0 0.0
  %240 = vmatmul.mubr.f32.gmra.mxu0 %v74
  %v241 = vpop.f32.mrf.mxu0
  %v242 = vadd.f32 %v61, %v241
  %v243 = vpop.f32.mrf.mxu0
  %244 = vmatprep.mubr.f32.mxu0 0.0
  %245 = vmatmul.mubr.f32.gmra.mxu0 %v77
  %v246 = vpop.f32.mrf.mxu0
  %v247 = vadd.f32 %v61, %v246
  %v248 = vpop.f32.mrf.mxu0
  %249 = vmatprep.mubr.f32.mxu0 0.0
  %250 = vmatmul.mubr.f32.gmra.mxu0 %v80
  %v251 = vpop.f32.mrf.mxu0
  %v252 = vadd.f32 %v61, %v251
  %v253 = vpop.f32.mrf.mxu0
  %254 = vmatprep.mubr.f32.mxu0 0.0
  %255 = vmatmul.mubr.f32.gmra.mxu0 %v83
  %v256 = vpop.f32.mrf.mxu0
  %v257 = vadd.f32 %v61, %v256
  %v258 = vpop.f32.mrf.mxu0
  %259 = vmatprep.mubr.f32.mxu0 0.0
  %260 = vmatmul.mubr.f32.gmra.mxu0 %v86
  %v261 = vpop.f32.mrf.mxu0
  %v262 = vadd.f32 %v61, %v261
  %v263 = vpop.f32.mrf.mxu0
  %264 = vmatprep.mubr.f32.mxu0 0.0
  %265 = vmatmul.mubr.f32.gmra.mxu0 %v89
  %v266 = vpop.f32.mrf.mxu0
  %v267 = vadd.f32 %v61, %v266
  %v268 = vpop.f32.mrf.mxu0
  %269 = vmatprep.mubr.f32.mxu0 0.0
  %270 = vmatmul.mubr.f32.gmra.mxu0 %v92
  %v271 = vpop.f32.mrf.mxu0
  %v272 = vadd.f32 %v61, %v271
  %v273 = vpop.f32.mrf.mxu0
  %274 = vmatprep.mubr.f32.mxu0 0.0
  %275 = vmatmul.mubr.f32.gmra.mxu0 %v95
  %v276 = vpop.f32.mrf.mxu0
  %v277 = vadd.f32 %v61, %v276
  %v278 = vpop.f32.mrf.mxu0
  %279 = vmatprep.mubr.f32.mxu0 0.0
  %280 = vmatmul.mubr.f32.gmra.mxu0 %v98
  %v281 = vpop.f32.mrf.mxu0
  %v282 = vadd.f32 %v61, %v281
  %v283 = vpop.f32.mrf.mxu0
  %284 = vmatprep.mubr.f32.mxu0 0.0
  %285 = vmatmul.mubr.f32.gmra.mxu0 %v101
  %v286 = vpop.f32.mrf.mxu0
  %v287 = vadd.f32 %v61, %v286
  %v288 = vpop.f32.mrf.mxu0
  %289 = vmatprep.mubr.f32.mxu0 0.0
  %290 = vmatmul.mubr.f32.gmra.mxu0 %v104
  %v291 = vpop.f32.mrf.mxu0
  %v292 = vadd.f32 %v61, %v291
  %v293 = vpop.f32.mrf.mxu0
  %294 = vmatprep.mubr.f32.mxu0 0.0
  %295 = vmatmul.mubr.f32.gmra.mxu0 %v107
  %v296 = vpop.f32.mrf.mxu0
  %v297 = vadd.f32 %v61, %v296
  %v298 = vpop.f32.mrf.mxu0
  %299 = vmatprep.mubr.f32.mxu0 0.0
  %300 = vmatmul.mubr.f32.gmra.mxu0 %v110
  %v301 = vpop.f32.mrf.mxu0
  %v302 = vadd.f32 %v61, %v301
  %v303 = vpop.f32.mrf.mxu0
  %304 = vmatprep.mubr.f32.mxu0 0.0
  %305 = vmatmul.mubr.f32.gmra.mxu0 %v113
  %v306 = vpop.f32.mrf.mxu0
  %v307 = vadd.f32 %v61, %v306
  %v308 = vpop.f32.mrf.mxu0
  %309 = vmatprep.mubr.f32.mxu0 0.0
  %310 = vmatmul.mubr.f32.gmra.mxu0 %v116
  %v311 = vpop.f32.mrf.mxu0
  %v312 = vadd.f32 %v61, %v311
  %v313 = vpop.f32.mrf.mxu0
  %314 = vmatprep.mubr.f32.mxu0 0.0
  %315 = vmatmul.mubr.f32.gmra.mxu0 %v119
  %v316 = vpop.f32.mrf.mxu0
  %v317 = vadd.f32 %v61, %v316
  %v318 = vpop.f32.mrf.mxu0
  %319 = vmatprep.mubr.f32.mxu0 0.0
  %320 = vmatmul.mubr.f32.gmra.mxu0 %v122
  %v321 = vpop.f32.mrf.mxu0
  %v322 = vadd.f32 %v61, %v321
  %v323 = vpop.f32.mrf.mxu0
  %324 = vmatprep.mubr.f32.mxu0 0.0
  %325 = vmatmul.mubr.f32.gmra.mxu0 %v125
  %v326 = vpop.f32.mrf.mxu0
  %v327 = vadd.f32 %v61, %v326
  %v328 = vpop.f32.mrf.mxu0
  %329 = vmatprep.mubr.f32.mxu0 0.0
  %330 = vmatmul.mubr.f32.gmra.mxu0 %v128
  %v331 = vpop.f32.mrf.mxu0
  %v332 = vadd.f32 %v61, %v331
  %v333 = vpop.f32.mrf.mxu0
  %334 = vmatprep.mubr.f32.mxu0 0.0
  %335 = vmatmul.mubr.f32.gmra.mxu0 %v131
  %v336 = vpop.f32.mrf.mxu0
  %v337 = vadd.f32 %v61, %v336
  %v338 = vpop.f32.mrf.mxu0
  %339 = vmatprep.mubr.f32.mxu0 0.0
  %340 = vmatmul.mubr.f32.gmra.mxu0 %v134
  %v341 = vpop.f32.mrf.mxu0
  %v342 = vadd.f32 %v61, %v341
  %v343 = vpop.f32.mrf.mxu0
  %344 = vmatprep.mubr.f32.mxu0 0.0
  %345 = vmatmul.mubr.f32.gmra.mxu0 %v137
  %v346 = vpop.f32.mrf.mxu0
  %v347 = vadd.f32 %v61, %v346
  %v348 = vpop.f32.mrf.mxu0
  %349 = vmatprep.mubr.f32.mxu0 0.0
  %350 = vmatmul.mubr.f32.gmra.mxu0 %v140
  %v351 = vpop.f32.mrf.mxu0
  %v352 = vadd.f32 %v61, %v351
  %v353 = vpop.f32.mrf.mxu0
  %354 = vmatprep.mubr.f32.mxu0 0.0
  %355 = vmatmul.mubr.f32.gmra.mxu0 %v143
  %v356 = vpop.f32.mrf.mxu0
  %v357 = vadd.f32 %v61, %v356
  %v358 = vpop.f32.mrf.mxu0
  %359 = vmatprep.mubr.f32.mxu0 0.0
  %360 = vmatmul.mubr.f32.gmra.mxu0 %v146
  %v361 = vpop.f32.mrf.mxu0
  %v362 = vadd.f32 %v61, %v361
  %v363 = vpop.f32.mrf.mxu0
  %364 = vmatprep.mubr.f32.mxu0 0.0
  %365 = vmatmul.mubr.f32.gmra.mxu0 %v149
  %v366 = vpop.f32.mrf.mxu0
  %v367 = vadd.f32 %v61, %v366
  %v368 = vpop.f32.mrf.mxu0
  %369 = vmatprep.mubr.f32.mxu0 0.0
  %370 = vmatmul.mubr.f32.gmra.mxu0 %v152
  %v371 = vpop.f32.mrf.mxu0
  %v372 = vadd.f32 %v61, %v371
  %v373 = vpop.f32.mrf.mxu0
  %374 = vmatprep.mubr.f32.mxu0 0.0
  %375 = vmatmul.mubr.f32.gmra.mxu0 %v155
  %v376 = vpop.f32.mrf.mxu0
  %v377 = vadd.f32 %v61, %v376
  %v378 = vpop.f32.mrf.mxu0
  %379 = vmatprep.mubr.f32.mxu0 0.0
  %380 = vmatmul.mubr.f32.gmra.mxu0 %v158
  %v381 = vpop.f32.mrf.mxu0
  %v382 = vadd.f32 %v61, %v381
  %v383 = vpop.f32.mrf.mxu0
  %384 = vdwg.mxu0
  %vm385 = vcmp.gt.f32.partialorder %v227, 20.0
  %vm386 = vcmp.gt.f32.partialorder %v232, 20.0
  %vm387 = vcmp.gt.f32.partialorder %v237, 20.0
  %vm388 = vcmp.gt.f32.partialorder %v242, 20.0
  %vm389 = vcmp.gt.f32.partialorder %v247, 20.0
  %vm390 = vcmp.gt.f32.partialorder %v252, 20.0
  %vm391 = vcmp.gt.f32.partialorder %v257, 20.0
  %vm392 = vcmp.gt.f32.partialorder %v262, 20.0
  %vm393 = vcmp.gt.f32.partialorder %v267, 20.0
  %vm394 = vcmp.gt.f32.partialorder %v272, 20.0
  %vm395 = vcmp.gt.f32.partialorder %v277, 20.0
  %vm396 = vcmp.gt.f32.partialorder %v282, 20.0
  %vm397 = vcmp.gt.f32.partialorder %v287, 20.0
  %vm398 = vcmp.gt.f32.partialorder %v292, 20.0
  %vm399 = vcmp.gt.f32.partialorder %v297, 20.0
  %vm400 = vcmp.gt.f32.partialorder %v302, 20.0
  %vm401 = vcmp.gt.f32.partialorder %v307, 20.0
  %vm402 = vcmp.gt.f32.partialorder %v312, 20.0
  %vm403 = vcmp.gt.f32.partialorder %v317, 20.0
  %vm404 = vcmp.gt.f32.partialorder %v322, 20.0
  %vm405 = vcmp.gt.f32.partialorder %v327, 20.0
  %vm406 = vcmp.gt.f32.partialorder %v332, 20.0
  %vm407 = vcmp.gt.f32.partialorder %v337, 20.0
  %vm408 = vcmp.gt.f32.partialorder %v342, 20.0
  %vm409 = vcmp.gt.f32.partialorder %v347, 20.0
  %vm410 = vcmp.gt.f32.partialorder %v352, 20.0
  %vm411 = vcmp.gt.f32.partialorder %v357, 20.0
  %vm412 = vcmp.gt.f32.partialorder %v362, 20.0
  %vm413 = vcmp.gt.f32.partialorder %v367, 20.0
  %vm414 = vcmp.gt.f32.partialorder %v372, 20.0
  %vm415 = vcmp.gt.f32.partialorder %v377, 20.0
  %vm416 = vcmp.gt.f32.partialorder %v382, 20.0
  %v417 = vmin.f32 %v227, 20.0
  %v418 = vmin.f32 %v232, 20.0
  %v419 = vmin.f32 %v237, 20.0
  %v420 = vmin.f32 %v242, 20.0
  %v421 = vmin.f32 %v247, 20.0
  %v422 = vmin.f32 %v252, 20.0
  %v423 = vmin.f32 %v257, 20.0
  %v424 = vmin.f32 %v262, 20.0
  %v425 = vmin.f32 %v267, 20.0
  %v426 = vmin.f32 %v272, 20.0
  %v427 = vmin.f32 %v277, 20.0
  %v428 = vmin.f32 %v282, 20.0
  %v429 = vmin.f32 %v287, 20.0
  %v430 = vmin.f32 %v292, 20.0
  %v431 = vmin.f32 %v297, 20.0
  %v432 = vmin.f32 %v302, 20.0
  %v433 = vmin.f32 %v307, 20.0
  %v434 = vmin.f32 %v312, 20.0
  %v435 = vmin.f32 %v317, 20.0
  %v436 = vmin.f32 %v322, 20.0
  %v437 = vmin.f32 %v327, 20.0
  %v438 = vmin.f32 %v332, 20.0
  %v439 = vmin.f32 %v337, 20.0
  %v440 = vmin.f32 %v342, 20.0
  %v441 = vmin.f32 %v347, 20.0
  %v442 = vmin.f32 %v352, 20.0
  %v443 = vmin.f32 %v357, 20.0
  %v444 = vmin.f32 %v362, 20.0
  %v445 = vmin.f32 %v367, 20.0
  %v446 = vmin.f32 %v372, 20.0
  %v447 = vmin.f32 %v377, 20.0
  %v448 = vmin.f32 %v382, 20.0
  %v449 = vmul.f32 %v417, 1.442695
  %v450 = vpow.pop %v449
  %v451 = vmul.f32 %v418, 1.442695
  %v452 = vpow.pop %v451
  %v453 = vmul.f32 %v419, 1.442695
  %v454 = vpow.pop %v453
  %v455 = vmul.f32 %v420, 1.442695
  %v456 = vpow.pop %v455
  %v457 = vmul.f32 %v421, 1.442695
  %v458 = vpow.pop %v457
  %v459 = vmul.f32 %v422, 1.442695
  %v460 = vpow.pop %v459
  %v461 = vmul.f32 %v423, 1.442695
  %v462 = vpow.pop %v461
  %v463 = vmul.f32 %v424, 1.442695
  %v464 = vpow.pop %v463
  %v465 = vmul.f32 %v425, 1.442695
  %v466 = vpow.pop %v465
  %v467 = vmul.f32 %v426, 1.442695
  %v468 = vpow.pop %v467
  %v469 = vmul.f32 %v427, 1.442695
  %v470 = vpow.pop %v469
  %v471 = vmul.f32 %v428, 1.442695
  %v472 = vpow.pop %v471
  %v473 = vmul.f32 %v429, 1.442695
  %v474 = vpow.pop %v473
  %v475 = vmul.f32 %v430, 1.442695
  %v476 = vpow.pop %v475
  %v477 = vmul.f32 %v431, 1.442695
  %v478 = vpow.pop %v477
  %v479 = vmul.f32 %v432, 1.442695
  %v480 = vpow.pop %v479
  %v481 = vmul.f32 %v433, 1.442695
  %v482 = vpow.pop %v481
  %v483 = vmul.f32 %v434, 1.442695
  %v484 = vpow.pop %v483
  %v485 = vmul.f32 %v435, 1.442695
  %v486 = vpow.pop %v485
  %v487 = vmul.f32 %v436, 1.442695
  %v488 = vpow.pop %v487
  %v489 = vmul.f32 %v437, 1.442695
  %v490 = vpow.pop %v489
  %v491 = vmul.f32 %v438, 1.442695
  %v492 = vpow.pop %v491
  %v493 = vmul.f32 %v439, 1.442695
  %v494 = vpow.pop %v493
  %v495 = vmul.f32 %v440, 1.442695
  %v496 = vpow.pop %v495
  %v497 = vmul.f32 %v441, 1.442695
  %v498 = vpow.pop %v497
  %v499 = vmul.f32 %v442, 1.442695
  %v500 = vpow.pop %v499
  %v501 = vmul.f32 %v443, 1.442695
  %v502 = vpow.pop %v501
  %v503 = vmul.f32 %v444, 1.442695
  %v504 = vpow.pop %v503
  %v505 = vmul.f32 %v445, 1.442695
  %v506 = vpow.pop %v505
  %v507 = vmul.f32 %v446, 1.442695
  %v508 = vpow.pop %v507
  %v509 = vmul.f32 %v447, 1.442695
  %v510 = vpow.pop %v509
  %v511 = vmul.f32 %v448, 1.442695
  %v512 = vpow.pop %v511
  %v513 = vadd.f32 %v450, 1.0
  %v514 = vlog2.pop %v513
  %v515 = vmul.f32 %v514, 0.6931472
  %v516 = vmul.f32 -0.5, %v450
  %v517 = vadd.f32 %v516, 1.0
  %v518 = vmul.f32 %v517, %v450
  %v519 = vand.u32 2147483647, %v450
  %vm520 = vcmp.lt.f32.partialorder %v519, 0.0004427343
  %v521 = vsel %vm520, %v518, %v515
  %v522 = vadd.f32 %v452, 1.0
  %v523 = vlog2.pop %v522
  %v524 = vmul.f32 %v523, 0.6931472
  %v525 = vmul.f32 -0.5, %v452
  %v526 = vadd.f32 %v525, 1.0
  %v527 = vmul.f32 %v526, %v452
  %v528 = vand.u32 2147483647, %v452
  %vm529 = vcmp.lt.f32.partialorder %v528, 0.0004427343
  %v530 = vsel %vm529, %v527, %v524
  %v531 = vadd.f32 %v454, 1.0
  %v532 = vlog2.pop %v531
  %v533 = vmul.f32 %v532, 0.6931472
  %v534 = vmul.f32 -0.5, %v454
  %v535 = vadd.f32 %v534, 1.0
  %v536 = vmul.f32 %v535, %v454
  %v537 = vand.u32 2147483647, %v454
  %vm538 = vcmp.lt.f32.partialorder %v537, 0.0004427343
  %v539 = vsel %vm538, %v536, %v533
  %v540 = vadd.f32 %v456, 1.0
  %v541 = vlog2.pop %v540
  %v542 = vmul.f32 %v541, 0.6931472
  %v543 = vmul.f32 -0.5, %v456
  %v544 = vadd.f32 %v543, 1.0
  %v545 = vmul.f32 %v544, %v456
  %v546 = vand.u32 2147483647, %v456
  %vm547 = vcmp.lt.f32.partialorder %v546, 0.0004427343
  %v548 = vsel %vm547, %v545, %v542
  %v549 = vadd.f32 %v458, 1.0
  %v550 = vlog2.pop %v549
  %v551 = vmul.f32 %v550, 0.6931472
  %v552 = vmul.f32 -0.5, %v458
  %v553 = vadd.f32 %v552, 1.0
  %v554 = vmul.f32 %v553, %v458
  %v555 = vand.u32 2147483647, %v458
  %vm556 = vcmp.lt.f32.partialorder %v555, 0.0004427343
  %v557 = vsel %vm556, %v554, %v551
  %v558 = vadd.f32 %v460, 1.0
  %v559 = vlog2.pop %v558
  %v560 = vmul.f32 %v559, 0.6931472
  %v561 = vmul.f32 -0.5, %v460
  %v562 = vadd.f32 %v561, 1.0
  %v563 = vmul.f32 %v562, %v460
  %v564 = vand.u32 2147483647, %v460
  %vm565 = vcmp.lt.f32.partialorder %v564, 0.0004427343
  %v566 = vsel %vm565, %v563, %v560
  %v567 = vadd.f32 %v462, 1.0
  %v568 = vlog2.pop %v567
  %v569 = vmul.f32 %v568, 0.6931472
  %v570 = vmul.f32 -0.5, %v462
  %v571 = vadd.f32 %v570, 1.0
  %v572 = vmul.f32 %v571, %v462
  %v573 = vand.u32 2147483647, %v462
  %vm574 = vcmp.lt.f32.partialorder %v573, 0.0004427343
  %v575 = vsel %vm574, %v572, %v569
  %v576 = vadd.f32 %v464, 1.0
  %v577 = vlog2.pop %v576
  %v578 = vmul.f32 %v577, 0.6931472
  %v579 = vmul.f32 -0.5, %v464
  %v580 = vadd.f32 %v579, 1.0
  %v581 = vmul.f32 %v580, %v464
  %v582 = vand.u32 2147483647, %v464
  %vm583 = vcmp.lt.f32.partialorder %v582, 0.0004427343
  %v584 = vsel %vm583, %v581, %v578
  %v585 = vadd.f32 %v466, 1.0
  %v586 = vlog2.pop %v585
  %v587 = vmul.f32 %v586, 0.6931472
  %v588 = vmul.f32 -0.5, %v466
  %v589 = vadd.f32 %v588, 1.0
  %v590 = vmul.f32 %v589, %v466
  %v591 = vand.u32 2147483647, %v466
  %vm592 = vcmp.lt.f32.partialorder %v591, 0.0004427343
  %v593 = vsel %vm592, %v590, %v587
  %v594 = vadd.f32 %v468, 1.0
  %v595 = vlog2.pop %v594
  %v596 = vmul.f32 %v595, 0.6931472
  %v597 = vmul.f32 -0.5, %v468
  %v598 = vadd.f32 %v597, 1.0
  %v599 = vmul.f32 %v598, %v468
  %v600 = vand.u32 2147483647, %v468
  %vm601 = vcmp.lt.f32.partialorder %v600, 0.0004427343
  %v602 = vsel %vm601, %v599, %v596
  %v603 = vadd.f32 %v470, 1.0
  %v604 = vlog2.pop %v603
  %v605 = vmul.f32 %v604, 0.6931472
  %v606 = vmul.f32 -0.5, %v470
  %v607 = vadd.f32 %v606, 1.0
  %v608 = vmul.f32 %v607, %v470
  %v609 = vand.u32 2147483647, %v470
  %vm610 = vcmp.lt.f32.partialorder %v609, 0.0004427343
  %v611 = vsel %vm610, %v608, %v605
  %v612 = vadd.f32 %v472, 1.0
  %v613 = vlog2.pop %v612
  %v614 = vmul.f32 %v613, 0.6931472
  %v615 = vmul.f32 -0.5, %v472
  %v616 = vadd.f32 %v615, 1.0
  %v617 = vmul.f32 %v616, %v472
  %v618 = vand.u32 2147483647, %v472
  %vm619 = vcmp.lt.f32.partialorder %v618, 0.0004427343
  %v620 = vsel %vm619, %v617, %v614
  %v621 = vadd.f32 %v474, 1.0
  %v622 = vlog2.pop %v621
  %v623 = vmul.f32 %v622, 0.6931472
  %v624 = vmul.f32 -0.5, %v474
  %v625 = vadd.f32 %v624, 1.0
  %v626 = vmul.f32 %v625, %v474
  %v627 = vand.u32 2147483647, %v474
  %vm628 = vcmp.lt.f32.partialorder %v627, 0.0004427343
  %v629 = vsel %vm628, %v626, %v623
  %v630 = vadd.f32 %v476, 1.0
  %v631 = vlog2.pop %v630
  %v632 = vmul.f32 %v631, 0.6931472
  %v633 = vmul.f32 -0.5, %v476
  %v634 = vadd.f32 %v633, 1.0
  %v635 = vmul.f32 %v634, %v476
  %v636 = vand.u32 2147483647, %v476
  %vm637 = vcmp.lt.f32.partialorder %v636, 0.0004427343
  %v638 = vsel %vm637, %v635, %v632
  %v639 = vadd.f32 %v478, 1.0
  %v640 = vlog2.pop %v639
  %v641 = vmul.f32 %v640, 0.6931472
  %v642 = vmul.f32 -0.5, %v478
  %v643 = vadd.f32 %v642, 1.0
  %v644 = vmul.f32 %v643, %v478
  %v645 = vand.u32 2147483647, %v478
  %vm646 = vcmp.lt.f32.partialorder %v645, 0.0004427343
  %v647 = vsel %vm646, %v644, %v641
  %v648 = vadd.f32 %v480, 1.0
  %v649 = vlog2.pop %v648
  %v650 = vmul.f32 %v649, 0.6931472
  %v651 = vmul.f32 -0.5, %v480
  %v652 = vadd.f32 %v651, 1.0
  %v653 = vmul.f32 %v652, %v480
  %v654 = vand.u32 2147483647, %v480
  %vm655 = vcmp.lt.f32.partialorder %v654, 0.0004427343
  %v656 = vsel %vm655, %v653, %v650
  %v657 = vadd.f32 %v482, 1.0
  %v658 = vlog2.pop %v657
  %v659 = vmul.f32 %v658, 0.6931472
  %v660 = vmul.f32 -0.5, %v482
  %v661 = vadd.f32 %v660, 1.0
  %v662 = vmul.f32 %v661, %v482
  %v663 = vand.u32 2147483647, %v482
  %vm664 = vcmp.lt.f32.partialorder %v663, 0.0004427343
  %v665 = vsel %vm664, %v662, %v659
  %v666 = vadd.f32 %v484, 1.0
  %v667 = vlog2.pop %v666
  %v668 = vmul.f32 %v667, 0.6931472
  %v669 = vmul.f32 -0.5, %v484
  %v670 = vadd.f32 %v669, 1.0
  %v671 = vmul.f32 %v670, %v484
  %v672 = vand.u32 2147483647, %v484
  %vm673 = vcmp.lt.f32.partialorder %v672, 0.0004427343
  %v674 = vsel %vm673, %v671, %v668
  %v675 = vadd.f32 %v486, 1.0
  %v676 = vlog2.pop %v675
  %v677 = vmul.f32 %v676, 0.6931472
  %v678 = vmul.f32 -0.5, %v486
  %v679 = vadd.f32 %v678, 1.0
  %v680 = vmul.f32 %v679, %v486
  %v681 = vand.u32 2147483647, %v486
  %vm682 = vcmp.lt.f32.partialorder %v681, 0.0004427343
  %v683 = vsel %vm682, %v680, %v677
  %v684 = vadd.f32 %v488, 1.0
  %v685 = vlog2.pop %v684
  %v686 = vmul.f32 %v685, 0.6931472
  %v687 = vmul.f32 -0.5, %v488
  %v688 = vadd.f32 %v687, 1.0
  %v689 = vmul.f32 %v688, %v488
  %v690 = vand.u32 2147483647, %v488
  %vm691 = vcmp.lt.f32.partialorder %v690, 0.0004427343
  %v692 = vsel %vm691, %v689, %v686
  %v693 = vadd.f32 %v490, 1.0
  %v694 = vlog2.pop %v693
  %v695 = vmul.f32 %v694, 0.6931472
  %v696 = vmul.f32 -0.5, %v490
  %v697 = vadd.f32 %v696, 1.0
  %v698 = vmul.f32 %v697, %v490
  %v699 = vand.u32 2147483647, %v490
  %vm700 = vcmp.lt.f32.partialorder %v699, 0.0004427343
  %v701 = vsel %vm700, %v698, %v695
  %v702 = vadd.f32 %v492, 1.0
  %v703 = vlog2.pop %v702
  %v704 = vmul.f32 %v703, 0.6931472
  %v705 = vmul.f32 -0.5, %v492
  %v706 = vadd.f32 %v705, 1.0
  %v707 = vmul.f32 %v706, %v492
  %v708 = vand.u32 2147483647, %v492
  %vm709 = vcmp.lt.f32.partialorder %v708, 0.0004427343
  %v710 = vsel %vm709, %v707, %v704
  %v711 = vadd.f32 %v494, 1.0
  %v712 = vlog2.pop %v711
  %v713 = vmul.f32 %v712, 0.6931472
  %v714 = vmul.f32 -0.5, %v494
  %v715 = vadd.f32 %v714, 1.0
  %v716 = vmul.f32 %v715, %v494
  %v717 = vand.u32 2147483647, %v494
  %vm718 = vcmp.lt.f32.partialorder %v717, 0.0004427343
  %v719 = vsel %vm718, %v716, %v713
  %v720 = vadd.f32 %v496, 1.0
  %v721 = vlog2.pop %v720
  %v722 = vmul.f32 %v721, 0.6931472
  %v723 = vmul.f32 -0.5, %v496
  %v724 = vadd.f32 %v723, 1.0
  %v725 = vmul.f32 %v724, %v496
  %v726 = vand.u32 2147483647, %v496
  %vm727 = vcmp.lt.f32.partialorder %v726, 0.0004427343
  %v728 = vsel %vm727, %v725, %v722
  %v729 = vadd.f32 %v498, 1.0
  %v730 = vlog2.pop %v729
  %v731 = vmul.f32 %v730, 0.6931472
  %v732 = vmul.f32 -0.5, %v498
  %v733 = vadd.f32 %v732, 1.0
  %v734 = vmul.f32 %v733, %v498
  %v735 = vand.u32 2147483647, %v498
  %vm736 = vcmp.lt.f32.partialorder %v735, 0.0004427343
  %v737 = vsel %vm736, %v734, %v731
  %v738 = vadd.f32 %v500, 1.0
  %v739 = vlog2.pop %v738
  %v740 = vmul.f32 %v739, 0.6931472
  %v741 = vmul.f32 -0.5, %v500
  %v742 = vadd.f32 %v741, 1.0
  %v743 = vmul.f32 %v742, %v500
  %v744 = vand.u32 2147483647, %v500
  %vm745 = vcmp.lt.f32.partialorder %v744, 0.0004427343
  %v746 = vsel %vm745, %v743, %v740
  %v747 = vadd.f32 %v502, 1.0
  %v748 = vlog2.pop %v747
  %v749 = vmul.f32 %v748, 0.6931472
  %v750 = vmul.f32 -0.5, %v502
  %v751 = vadd.f32 %v750, 1.0
  %v752 = vmul.f32 %v751, %v502
  %v753 = vand.u32 2147483647, %v502
  %vm754 = vcmp.lt.f32.partialorder %v753, 0.0004427343
  %v755 = vsel %vm754, %v752, %v749
  %v756 = vadd.f32 %v504, 1.0
  %v757 = vlog2.pop %v756
  %v758 = vmul.f32 %v757, 0.6931472
  %v759 = vmul.f32 -0.5, %v504
  %v760 = vadd.f32 %v759, 1.0
  %v761 = vmul.f32 %v760, %v504
  %v762 = vand.u32 2147483647, %v504
  %vm763 = vcmp.lt.f32.partialorder %v762, 0.0004427343
  %v764 = vsel %vm763, %v761, %v758
  %v765 = vadd.f32 %v506, 1.0
  %v766 = vlog2.pop %v765
  %v767 = vmul.f32 %v766, 0.6931472
  %v768 = vmul.f32 -0.5, %v506
  %v769 = vadd.f32 %v768, 1.0
  %v770 = vmul.f32 %v769, %v506
  %v771 = vand.u32 2147483647, %v506
  %vm772 = vcmp.lt.f32.partialorder %v771, 0.0004427343
  %v773 = vsel %vm772, %v770, %v767
  %v774 = vadd.f32 %v508, 1.0
  %v775 = vlog2.pop %v774
  %v776 = vmul.f32 %v775, 0.6931472
  %v777 = vmul.f32 -0.5, %v508
  %v778 = vadd.f32 %v777, 1.0
  %v779 = vmul.f32 %v778, %v508
  %v780 = vand.u32 2147483647, %v508
  %vm781 = vcmp.lt.f32.partialorder %v780, 0.0004427343
  %v782 = vsel %vm781, %v779, %v776
  %v783 = vadd.f32 %v510, 1.0
  %v784 = vlog2.pop %v783
  %v785 = vmul.f32 %v784, 0.6931472
  %v786 = vmul.f32 -0.5, %v510
  %v787 = vadd.f32 %v786, 1.0
  %v788 = vmul.f32 %v787, %v510
  %v789 = vand.u32 2147483647, %v510
  %vm790 = vcmp.lt.f32.partialorder %v789, 0.0004427343
  %v791 = vsel %vm790, %v788, %v785
  %v792 = vadd.f32 %v512, 1.0
  %v793 = vlog2.pop %v792
  %v794 = vmul.f32 %v793, 0.6931472
  %v795 = vmul.f32 -0.5, %v512
  %v796 = vadd.f32 %v795, 1.0
  %v797 = vmul.f32 %v796, %v512
  %v798 = vand.u32 2147483647, %v512
  %vm799 = vcmp.lt.f32.partialorder %v798, 0.0004427343
  %v800 = vsel %vm799, %v797, %v794
  %v801 = vsel %vm385, %v227, %v521
  %v802 = vsel %vm386, %v232, %v530
  %v803 = vsel %vm387, %v237, %v539
  %v804 = vsel %vm388, %v242, %v548
  %v805 = vsel %vm389, %v247, %v557
  %v806 = vsel %vm390, %v252, %v566
  %v807 = vsel %vm391, %v257, %v575
  %v808 = vsel %vm392, %v262, %v584
  %v809 = vsel %vm393, %v267, %v593
  %v810 = vsel %vm394, %v272, %v602
  %v811 = vsel %vm395, %v277, %v611
  %v812 = vsel %vm396, %v282, %v620
  %v813 = vsel %vm397, %v287, %v629
  %v814 = vsel %vm398, %v292, %v638
  %v815 = vsel %vm399, %v297, %v647
  %v816 = vsel %vm400, %v302, %v656
  %v817 = vsel %vm401, %v307, %v665
  %v818 = vsel %vm402, %v312, %v674
  %v819 = vsel %vm403, %v317, %v683
  %v820 = vsel %vm404, %v322, %v692
  %v821 = vsel %vm405, %v327, %v701
  %v822 = vsel %vm406, %v332, %v710
  %v823 = vsel %vm407, %v337, %v719
  %v824 = vsel %vm408, %v342, %v728
  %v825 = vsel %vm409, %v347, %v737
  %v826 = vsel %vm410, %v352, %v746
  %v827 = vsel %vm411, %v357, %v755
  %v828 = vsel %vm412, %v362, %v764
  %v829 = vsel %vm413, %v367, %v773
  %v830 = vsel %vm414, %v372, %v782
  %v831 = vsel %vm415, %v377, %v791
  %v832 = vsel %vm416, %v382, %v800
  %v833 = vld [vmem:[%s3] sm:$0xff]
  %v834 = vld [vmem:[%s3 + $0x8] sm:$0xff]
  %v835 = vld [vmem:[%s3 + $0x10] sm:$0xff]
  %v836 = vld [vmem:[%s3 + $0x18] sm:$0xff]
  %v837 = vld [vmem:[%s3 + $0x20] sm:$0xff]
  %v838 = vld [vmem:[%s3 + $0x28] sm:$0xff]
  %v839 = vld [vmem:[%s3 + $0x30] sm:$0xff]
  %v840 = vld [vmem:[%s3 + $0x38] sm:$0xff]
  %v841 = vld [vmem:[%s3 + $0x40] sm:$0xff]
  %v842 = vld [vmem:[%s3 + $0x48] sm:$0xff]
  %v843 = vld [vmem:[%s3 + $0x50] sm:$0xff]
  %v844 = vld [vmem:[%s3 + $0x58] sm:$0xff]
  %v845 = vld [vmem:[%s3 + $0x60] sm:$0xff]
  %v846 = vld [vmem:[%s3 + $0x68] sm:$0xff]
  %v847 = vld [vmem:[%s3 + $0x70] sm:$0xff]
  %v848 = vld [vmem:[%s3 + $0x78] sm:$0xff]
  %v849 = vld [vmem:[%s4] sm:$0x1]
  %v851 = vlaneseq
  %v852 = vshrl.u32 %v851, 7
  %v853 = vsub.s32 0, %v852
  %v854 = vrot.slane %v849, %v853
  %856 = vmatprep.subr.mxu0 0.0
  %857 = vmatpush1.msra.mxu0 %v848
  %858 = vmatprep.subr.mxu0 0.0
  %859 = vmatpush1.msra.mxu0 %v847
  %860 = vmatprep.subr.mxu0 0.0
  %861 = vmatpush1.msra.mxu0 %v846
  %862 = vmatprep.subr.mxu0 0.0
  %863 = vmatpush1.msra.mxu0 %v845
  %864 = vmatprep.subr.mxu0 0.0
  %865 = vmatpush1.msra.mxu0 %v844
  %866 = vmatprep.subr.mxu0 0.0
  %867 = vmatpush1.msra.mxu0 %v843
  %868 = vmatprep.subr.mxu0 0.0
  %869 = vmatpush1.msra.mxu0 %v842
  %870 = vmatprep.subr.mxu0 0.0
  %871 = vmatpush1.msra.mxu0 %v841
  %872 = vmatprep.subr.mxu0 0.0
  %873 = vmatpush1.msra.mxu0 %v840
  %874 = vmatprep.subr.mxu0 0.0
  %875 = vmatpush1.msra.mxu0 %v839
  %876 = vmatprep.subr.mxu0 0.0
  %877 = vmatpush1.msra.mxu0 %v838
  %878 = vmatprep.subr.mxu0 0.0
  %879 = vmatpush1.msra.mxu0 %v837
  %880 = vmatprep.subr.mxu0 0.0
  %881 = vmatpush1.msra.mxu0 %v836
  %882 = vmatprep.subr.mxu0 0.0
  %883 = vmatpush1.msra.mxu0 %v835
  %884 = vmatprep.subr.mxu0 0.0
  %885 = vmatpush1.msra.mxu0 %v834
  %886 = vmatprep.subr.mxu0 0.0
  %887 = vmatpush1.msra.mxu0 %v833
  %888 = vmatprep.subr.mxu0 0.0
  %889 = vmatpush2.msra.mxu0 0.0
  %890 = vmatprep.subr.mxu0 0.0
  %891 = vmatpush2.msra.mxu0 0.0
  %892 = vmatprep.subr.mxu0 0.0
  %893 = vmatpush2.msra.mxu0 0.0
  %894 = vmatprep.subr.mxu0 0.0
  %895 = vmatpush2.msra.mxu0 0.0
  %896 = vmatprep.subr.mxu0 0.0
  %897 = vmatpush2.msra.mxu0 0.0
  %898 = vmatprep.subr.mxu0 0.0
  %899 = vmatpush2.msra.mxu0 0.0
  %900 = vmatprep.subr.mxu0 0.0
  %901 = vmatpush2.msra.mxu0 0.0
  %902 = vmatprep.subr.mxu0 0.0
  %903 = vmatpush2.msra.mxu0 0.0
  %904 = vmatprep.subr.mxu0 0.0
  %905 = vmatpush2.msra.mxu0 0.0
  %906 = vmatprep.subr.mxu0 0.0
  %907 = vmatpush2.msra.mxu0 0.0
  %908 = vmatprep.subr.mxu0 0.0
  %909 = vmatpush2.msra.mxu0 0.0
  %910 = vmatprep.subr.mxu0 0.0
  %911 = vmatpush2.msra.mxu0 0.0
  %912 = vmatprep.subr.mxu0 0.0
  %913 = vmatpush2.msra.mxu0 0.0
  %914 = vmatprep.subr.mxu0 0.0
  %915 = vmatpush2.msra.mxu0 0.0
  %916 = vmatprep.subr.mxu0 0.0
  %917 = vmatpush2.msra.mxu0 0.0
  %918 = vmatprep.subr.mxu0 0.0
  %919 = vmatpush2.msra.mxu0 0.0
  %920 = vmatprep.mubr.f32.mxu0 0.0
  %921 = vmatmul.mubr.f32.gmra.mxu0 %v801
  %v922 = vpop.f32.mrf.mxu0
  %v923 = vadd.f32 %v854, %v922
  %v924 = vpop.f32.mrf.mxu0
  %925 = vmatprep.mubr.f32.mxu0 0.0
  %926 = vmatmul.mubr.f32.gmra.mxu0 %v802
  %v927 = vpop.f32.mrf.mxu0
  %v928 = vadd.f32 %v854, %v927
  %v929 = vpop.f32.mrf.mxu0
  %930 = vmatprep.mubr.f32.mxu0 0.0
  %931 = vmatmul.mubr.f32.gmra.mxu0 %v803
  %v932 = vpop.f32.mrf.mxu0
  %v933 = vadd.f32 %v854, %v932
  %v934 = vpop.f32.mrf.mxu0
  %935 = vmatprep.mubr.f32.mxu0 0.0
  %936 = vmatmul.mubr.f32.gmra.mxu0 %v804
  %v937 = vpop.f32.mrf.mxu0
  %v938 = vadd.f32 %v854, %v937
  %v939 = vpop.f32.mrf.mxu0
  %940 = vmatprep.mubr.f32.mxu0 0.0
  %941 = vmatmul.mubr.f32.gmra.mxu0 %v805
  %v942 = vpop.f32.mrf.mxu0
  %v943 = vadd.f32 %v854, %v942
  %v944 = vpop.f32.mrf.mxu0
  %945 = vmatprep.mubr.f32.mxu0 0.0
  %946 = vmatmul.mubr.f32.gmra.mxu0 %v806
  %v947 = vpop.f32.mrf.mxu0
  %v948 = vadd.f32 %v854, %v947
  %v949 = vpop.f32.mrf.mxu0
  %950 = vmatprep.mubr.f32.mxu0 0.0
  %951 = vmatmul.mubr.f32.gmra.mxu0 %v807
  %v952 = vpop.f32.mrf.mxu0
  %v953 = vadd.f32 %v854, %v952
  %v954 = vpop.f32.mrf.mxu0
  %955 = vmatprep.mubr.f32.mxu0 0.0
  %956 = vmatmul.mubr.f32.gmra.mxu0 %v808
  %v957 = vpop.f32.mrf.mxu0
  %v958 = vadd.f32 %v854, %v957
  %v959 = vpop.f32.mrf.mxu0
  %960 = vmatprep.mubr.f32.mxu0 0.0
  %961 = vmatmul.mubr.f32.gmra.mxu0 %v809
  %v962 = vpop.f32.mrf.mxu0
  %v963 = vadd.f32 %v854, %v962
  %v964 = vpop.f32.mrf.mxu0
  %965 = vmatprep.mubr.f32.mxu0 0.0
  %966 = vmatmul.mubr.f32.gmra.mxu0 %v810
  %v967 = vpop.f32.mrf.mxu0
  %v968 = vadd.f32 %v854, %v967
  %v969 = vpop.f32.mrf.mxu0
  %970 = vmatprep.mubr.f32.mxu0 0.0
  %971 = vmatmul.mubr.f32.gmra.mxu0 %v811
  %v972 = vpop.f32.mrf.mxu0
  %v973 = vadd.f32 %v854, %v972
  %v974 = vpop.f32.mrf.mxu0
  %975 = vmatprep.mubr.f32.mxu0 0.0
  %976 = vmatmul.mubr.f32.gmra.mxu0 %v812
  %v977 = vpop.f32.mrf.mxu0
  %v978 = vadd.f32 %v854, %v977
  %v979 = vpop.f32.mrf.mxu0
  %980 = vmatprep.mubr.f32.mxu0 0.0
  %981 = vmatmul.mubr.f32.gmra.mxu0 %v813
  %v982 = vpop.f32.mrf.mxu0
  %v983 = vadd.f32 %v854, %v982
  %v984 = vpop.f32.mrf.mxu0
  %985 = vmatprep.mubr.f32.mxu0 0.0
  %986 = vmatmul.mubr.f32.gmra.mxu0 %v814
  %v987 = vpop.f32.mrf.mxu0
  %v988 = vadd.f32 %v854, %v987
  %v989 = vpop.f32.mrf.mxu0
  %990 = vmatprep.mubr.f32.mxu0 0.0
  %991 = vmatmul.mubr.f32.gmra.mxu0 %v815
  %v992 = vpop.f32.mrf.mxu0
  %v993 = vadd.f32 %v854, %v992
  %v994 = vpop.f32.mrf.mxu0
  %995 = vmatprep.mubr.f32.mxu0 0.0
  %996 = vmatmul.mubr.f32.gmra.mxu0 %v816
  %v997 = vpop.f32.mrf.mxu0
  %v998 = vadd.f32 %v854, %v997
  %v999 = vpop.f32.mrf.mxu0
  %1000 = vmatprep.mubr.f32.mxu0 0.0
  %1001 = vmatmul.mubr.f32.gmra.mxu0 %v817
  %v1002 = vpop.f32.mrf.mxu0
  %v1003 = vadd.f32 %v854, %v1002
  %v1004 = vpop.f32.mrf.mxu0
  %1005 = vmatprep.mubr.f32.mxu0 0.0
  %1006 = vmatmul.mubr.f32.gmra.mxu0 %v818
  %v1007 = vpop.f32.mrf.mxu0
  %v1008 = vadd.f32 %v854, %v1007
  %v1009 = vpop.f32.mrf.mxu0
  %1010 = vmatprep.mubr.f32.mxu0 0.0
  %1011 = vmatmul.mubr.f32.gmra.mxu0 %v819
  %v1012 = vpop.f32.mrf.mxu0
  %v1013 = vadd.f32 %v854, %v1012
  %v1014 = vpop.f32.mrf.mxu0
  %1015 = vmatprep.mubr.f32.mxu0 0.0
  %1016 = vmatmul.mubr.f32.gmra.mxu0 %v820
  %v1017 = vpop.f32.mrf.mxu0
  %v1018 = vadd.f32 %v854, %v1017
  %v1019 = vpop.f32.mrf.mxu0
  %1020 = vmatprep.mubr.f32.mxu0 0.0
  %1021 = vmatmul.mubr.f32.gmra.mxu0 %v821
  %v1022 = vpop.f32.mrf.mxu0
  %v1023 = vadd.f32 %v854, %v1022
  %v1024 = vpop.f32.mrf.mxu0
  %1025 = vmatprep.mubr.f32.mxu0 0.0
  %1026 = vmatmul.mubr.f32.gmra.mxu0 %v822
  %v1027 = vpop.f32.mrf.mxu0
  %v1028 = vadd.f32 %v854, %v1027
  %v1029 = vpop.f32.mrf.mxu0
  %1030 = vmatprep.mubr.f32.mxu0 0.0
  %1031 = vmatmul.mubr.f32.gmra.mxu0 %v823
  %v1032 = vpop.f32.mrf.mxu0
  %v1033 = vadd.f32 %v854, %v1032
  %v1034 = vpop.f32.mrf.mxu0
  %1035 = vmatprep.mubr.f32.mxu0 0.0
  %1036 = vmatmul.mubr.f32.gmra.mxu0 %v824
  %v1037 = vpop.f32.mrf.mxu0
  %v1038 = vadd.f32 %v854, %v1037
  %v1039 = vpop.f32.mrf.mxu0
  %1040 = vmatprep.mubr.f32.mxu0 0.0
  %1041 = vmatmul.mubr.f32.gmra.mxu0 %v825
  %v1042 = vpop.f32.mrf.mxu0
  %v1043 = vadd.f32 %v854, %v1042
  %v1044 = vpop.f32.mrf.mxu0
  %1045 = vmatprep.mubr.f32.mxu0 0.0
  %1046 = vmatmul.mubr.f32.gmra.mxu0 %v826
  %v1047 = vpop.f32.mrf.mxu0
  %v1048 = vadd.f32 %v854, %v1047
  %v1049 = vpop.f32.mrf.mxu0
  %1050 = vmatprep.mubr.f32.mxu0 0.0
  %1051 = vmatmul.mubr.f32.gmra.mxu0 %v827
  %v1052 = vpop.f32.mrf.mxu0
  %v1053 = vadd.f32 %v854, %v1052
  %v1054 = vpop.f32.mrf.mxu0
  %1055 = vmatprep.mubr.f32.mxu0 0.0
  %1056 = vmatmul.mubr.f32.gmra.mxu0 %v828
  %v1057 = vpop.f32.mrf.mxu0
  %v1058 = vadd.f32 %v854, %v1057
  %v1059 = vpop.f32.mrf.mxu0
  %1060 = vmatprep.mubr.f32.mxu0 0.0
  %1061 = vmatmul.mubr.f32.gmra.mxu0 %v829
  %v1062 = vpop.f32.mrf.mxu0
  %v1063 = vadd.f32 %v854, %v1062
  %v1064 = vpop.f32.mrf.mxu0
  %1065 = vmatprep.mubr.f32.mxu0 0.0
  %1066 = vmatmul.mubr.f32.gmra.mxu0 %v830
  %v1067 = vpop.f32.mrf.mxu0
  %v1068 = vadd.f32 %v854, %v1067
  %v1069 = vpop.f32.mrf.mxu0
  %1070 = vmatprep.mubr.f32.mxu0 0.0
  %1071 = vmatmul.mubr.f32.gmra.mxu0 %v831
  %v1072 = vpop.f32.mrf.mxu0
  %v1073 = vadd.f32 %v854, %v1072
  %v1074 = vpop.f32.mrf.mxu0
  %1075 = vmatprep.mubr.f32.mxu0 0.0
  %1076 = vmatmul.mubr.f32.gmra.mxu0 %v832
  %v1077 = vpop.f32.mrf.mxu0
  %v1078 = vadd.f32 %v854, %v1077
  %v1079 = vpop.f32.mrf.mxu0
  %1080 = vdwg.mxu0
  %1081 = vst [vmem:[%s5] sm:$0xff] %v923
  %1082 = vst [vmem:[%s5 + $0x8] sm:$0xff] %v928
  %1083 = vst [vmem:[%s5 + $0x10] sm:$0xff] %v933
  %1084 = vst [vmem:[%s5 + $0x18] sm:$0xff] %v938
  %1085 = vst [vmem:[%s5 + $0x20] sm:$0xff] %v943
  %1086 = vst [vmem:[%s5 + $0x28] sm:$0xff] %v948
  %1087 = vst [vmem:[%s5 + $0x30] sm:$0xff] %v953
  %1088 = vst [vmem:[%s5 + $0x38] sm:$0xff] %v958
  %1089 = vst [vmem:[%s5 + $0x40] sm:$0xff] %v963
  %1090 = vst [vmem:[%s5 + $0x48] sm:$0xff] %v968
  %1091 = vst [vmem:[%s5 + $0x50] sm:$0xff] %v973
  %1092 = vst [vmem:[%s5 + $0x58] sm:$0xff] %v978
  %1093 = vst [vmem:[%s5 + $0x60] sm:$0xff] %v983
  %1094 = vst [vmem:[%s5 + $0x68] sm:$0xff] %v988
  %1095 = vst [vmem:[%s5 + $0x70] sm:$0xff] %v993
  %1096 = vst [vmem:[%s5 + $0x78] sm:$0xff] %v998
  %1097 = vst [vmem:[%s5 + $0x80] sm:$0xff] %v1003
  %1098 = vst [vmem:[%s5 + $0x88] sm:$0xff] %v1008
  %1099 = vst [vmem:[%s5 + $0x90] sm:$0xff] %v1013
  %1100 = vst [vmem:[%s5 + $0x98] sm:$0xff] %v1018
  %1101 = vst [vmem:[%s5 + $0xa0] sm:$0xff] %v1023
  %1102 = vst [vmem:[%s5 + $0xa8] sm:$0xff] %v1028
  %1103 = vst [vmem:[%s5 + $0xb0] sm:$0xff] %v1033
  %1104 = vst [vmem:[%s5 + $0xb8] sm:$0xff] %v1038
  %1105 = vst [vmem:[%s5 + $0xc0] sm:$0xff] %v1043
  %1106 = vst [vmem:[%s5 + $0xc8] sm:$0xff] %v1048
  %1107 = vst [vmem:[%s5 + $0xd0] sm:$0xff] %v1053
  %1108 = vst [vmem:[%s5 + $0xd8] sm:$0xff] %v1058
  %1109 = vst [vmem:[%s5 + $0xe0] sm:$0xff] %v1063
  %1110 = vst [vmem:[%s5 + $0xe8] sm:$0xff] %v1068
  %1111 = vst [vmem:[%s5 + $0xf0] sm:$0xff] %v1073
  %1112 = vst [vmem:[%s5 + $0xf8] sm:$0xff] %v1078
  // Predicated region
  $region22: #{example_module_forward.1} parent=0 // pred_check
    _
  $region23: #{example_module_forward.1} parent=0 // pred_check_branch
    %1114 = sbr.rel (0) target = $region25
  $region24: #{example_module_forward.1} parent=0 // pred_region
    _
  $region25: #{example_module_forward.1} parent=0 // pred_fallthru
    _
  // Predicated region
  $region26: #{example_module_forward.1} parent=0 // pred_check
    _
  $region27: #{example_module_forward.1} parent=0 // pred_check_branch
    %1116 = sbr.rel (0) target = $region29
  $region28: #{example_module_forward.1} parent=0 // pred_region
    _
  $region29: #{example_module_forward.1} parent=0 // pred_fallthru
    _

</llo_original>
